<compile_context>
chip_gen: v7x
topology: tpu7x:2x2x1
jax: 0.10.0
libtpu: 0.0.40
codegen_flags: <defaults>
</compile_context>

<pallas_src>
import functools

import jax
import jax.numpy as jnp
from jax.experimental import pallas as pl
from jax.experimental.pallas import tpu as pltpu


def _round_up(n, m):
    return ((n + m - 1) // m) * m


def _cdiv(a, b):
    return (a + b - 1) // b


def _mlp_kernel(x_ref,
                w1_ref, t1_ref,
                w2_ref, t2_ref,
                w3_ref, t3_ref,
                w4_ref, t4_ref,
                out_ref):
    # x tile arrives in f32 straight from HBM (no wrapper-side cast pass).
    x = x_ref[...]                                                  # (TB, D_in) f32

    # fc1 + folded bn1 + relu -- f32 operands keep the input un-quantized;
    # compute is sub-nanosecond per row, far below the HBM-bound floor.
    h = jnp.dot(x, w1_ref[...], preferred_element_type=jnp.float32)
    h = jnp.maximum(h + t1_ref[...], 0.0)                           # (TB, 128) f32

    # fc2 + folded bn2 + relu (bf16 resident weights, f32 accumulation)
    h = jnp.dot(h.astype(jnp.bfloat16), w2_ref[...],
                preferred_element_type=jnp.float32)
    h = jnp.maximum(h + t2_ref[...], 0.0)                           # (TB, 64) f32

    # fc3 + folded bn3 + relu
    h = jnp.dot(h.astype(jnp.bfloat16), w3_ref[...],
                preferred_element_type=jnp.float32)
    h = jnp.maximum(h + t3_ref[...], 0.0)                           # (TB, 32) f32

    # fc4 logits (no activation), padded 3 -> 8 lanes only: 16x less writeback
    # than a 128-lane pad; the masked vst costs ~1 slot per 8 rows (vst slack).
    out_ref[...] = jnp.dot(h.astype(jnp.bfloat16), w4_ref[...],
                           preferred_element_type=jnp.float32) + t4_ref[...]


def _choose_batch_tile(batch, block_batch):
    """Balanced batch tile: minimal tail padding, >=2 grid steps when large."""
    n_tiles = max(1, _cdiv(batch, block_batch))
    # v7x megacore: with dimension_semantics=("parallel",) the batch grid is
    # sharded across the two TensorCores -- make sure there are >= 2 steps
    # whenever there is enough work to split.
    if batch >= 512:
        n_tiles = max(n_tiles, 2)
    tb = _round_up(_cdiv(batch, n_tiles), 16)      # <16 wasted rows per call
    tb = min(tb, _round_up(batch, 8))              # never far bigger than batch
    return tb


@functools.partial(jax.jit, static_argnames=("block_batch",))
def vibration_classifier_forward(x, params, block_batch=4096):
    """x: (B, input_size) float32 -> (B, 3) float32 logits."""
    B, D_in = x.shape
    TB = _choose_batch_tile(B, block_batch)
    grid = (_cdiv(B, TB),)

    # x / out are tiled over the batch (double-buffered by the pipeline);
    # weights and shifts are grid-constant and stay VMEM-resident.
    x_spec = pl.BlockSpec((TB, D_in), lambda i: (i, 0))
    out_spec = pl.BlockSpec((TB, 8), lambda i: (i, 0))

    def resident(p):
        return pl.BlockSpec(p.shape, lambda i: (0,) * p.ndim)

    in_specs = [x_spec] + [resident(p) for p in params]

    out = pl.pallas_call(
        _mlp_kernel,
        out_shape=jax.ShapeDtypeStruct((B, 8), jnp.float32),
        grid=grid,
        in_specs=in_specs,
        out_specs=out_spec,
        compiler_params=pltpu.CompilerParams(
            dimension_semantics=("parallel",)),
    )(x, *params)

    return out[:, :3]


def fold_bn_into_weight(w, bias, gamma, beta, mean, var, eps=1e-5,
                        w_dtype=jnp.bfloat16):
    """Fold Linear bias + eval-mode BatchNorm1d into (W*scale, shift)."""
    scale = gamma / jnp.sqrt(var + eps)                              # (F,)
    w_folded = (w * scale[None, :]).astype(w_dtype)                  # (D_in, F)
    shift = ((bias - mean) * scale + beta)[None, :].astype(jnp.float32)
    return w_folded, shift


def make_params(input_size, key):
    """Deterministic synthetic parameters matching the module's shapes."""
    dims = [(input_size, 128), (128, 64), (64, 32), (32, 3)]
    keys = jax.random.split(key, 16)
    ki = iter(range(16))

    def linear(din, dout):
        w = jax.random.normal(keys[next(ki)], (din, dout), jnp.float32) * 0.05
        b = jax.random.normal(keys[next(ki)], (dout,), jnp.float32) * 0.05
        return w, b

    def bn_stats(d):
        gamma = 1.0 + 0.1 * jax.random.normal(keys[next(ki)], (d,), jnp.float32)
        beta = 0.1 * jax.random.normal(keys[next(ki)], (d,), jnp.float32)
        mean = 0.05 * jnp.arange(d, dtype=jnp.float32) / d
        var = 1.0 + 0.01 * jnp.arange(d, dtype=jnp.float32) / d
        return gamma, beta, mean, var

    w1, b1 = linear(*dims[0]); g1, be1, m1, v1 = bn_stats(128)
    w2, b2 = linear(*dims[1]); g2, be2, m2, v2 = bn_stats(64)
    w3, b3 = linear(*dims[2]); g3, be3, m3, v3 = bn_stats(32)
    w4, b4 = linear(*dims[3])

    # fc1 kept in f32 (un-quantized input path); fc2/fc3 folded to bf16.
    w1f, t1 = fold_bn_into_weight(w1, b1, g1, be1, m1, v1, w_dtype=jnp.float32)
    w2f, t2 = fold_bn_into_weight(w2, b2, g2, be2, m2, v2)
    w3f, t3 = fold_bn_into_weight(w3, b3, g3, be3, m3, v3)

    # fc4: pad the 3 output lanes to 8 (not 128) -- legal block, 16x less
    # output HBM writeback.
    w4p = jnp.zeros((32, 8), jnp.float32).at[:, :3].set(w4).astype(jnp.bfloat16)
    t4 = jnp.zeros((1, 8), jnp.float32).at[0, :3].set(b4)

    params = (w1f, t1, w2f, t2, w3f, t3, w4p, t4)
    raw = dict(w1=w1, b1=b1, g1=g1, be1=be1, m1=m1, v1=v1,
               w2=w2, b2=b2, g2=g2, be2=be2, m2=m2, v2=v2,
               w3=w3, b3=b3, g3=g3, be3=be3, m3=m3, v3=v3,
               w4=w4, b4=b4)
    return params, raw


def reference_forward(x, r, eps=1e-5):
    """Pure-JAX f32 reference mirroring the PyTorch eval-mode forward."""
    def bn(h, g, be, m, v):
        return g * (h - m) / jnp.sqrt(v + eps) + be
    h = jnp.maximum(bn(x @ r['w1'] + r['b1'], r['g1'], r['be1'], r['m1'], r['v1']), 0.0)
    h = jnp.maximum(bn(h @ r['w2'] + r['b2'], r['g2'], r['be2'], r['m2'], r['v2']), 0.0)
    h = jnp.maximum(bn(h @ r['w3'] + r['b3'], r['g3'], r['be3'], r['m3'], r['v3']), 0.0)
    return h @ r['w4'] + r['b4']


if __name__ == "__main__":
    # TODO(synk): input_size normally comes from torch.load('final_model.pth');
    # use a synthetic stand-in here (no file I/O allowed).
    input_size = 32
    batch = 8

    key = jax.random.PRNGKey(0)
    kx, kp = jax.random.split(key)
    x = jax.random.normal(kx, (batch, input_size), jnp.float32)

    params, raw = make_params(input_size, kp)

    out = vibration_classifier_forward(x, params)
    out = jax.block_until_ready(out)

    ref = reference_forward(x, raw)
    assert out.shape == (batch, 3)
    # bf16 weights/activations on layers 2-4 (f32 accumulation, f32 fc1) ->
    # loosened tolerance vs the pure-f32 reference.
    assert jnp.allclose(out, ref, atol=2e-2, rtol=2e-2), "mismatch vs reference"

    print("KERNEL_OK")
</pallas_src>

<mosaic_0001>
module attributes {stable_mosaic.version = 11 : i64} {
  func.func @_mlp_kernel(%arg0: i32, %arg1: memref<8x32xf32, #tpu.memory_space<vmem>>, %arg2: memref<32x128xf32, #tpu.memory_space<vmem>>, %arg3: memref<1x128xf32, #tpu.memory_space<vmem>>, %arg4: memref<128x64xbf16, #tpu.memory_space<vmem>>, %arg5: memref<1x64xf32, #tpu.memory_space<vmem>>, %arg6: memref<64x32xbf16, #tpu.memory_space<vmem>>, %arg7: memref<1x32xf32, #tpu.memory_space<vmem>>, %arg8: memref<32x8xbf16, #tpu.memory_space<vmem>>, %arg9: memref<1x8xf32, #tpu.memory_space<vmem>>, %arg10: memref<8x8xf32, #tpu.memory_space<vmem>>) attributes {dimension_semantics = [#tpu.dimension_semantics<parallel>], iteration_bounds = array<i64: 1>, scalar_prefetch = 0 : i64, scratch_operands = 0 : i64, tpu.core_type = #tpu.core_type<tc>, window_params = [{transform_indices = @transform_0, window_bounds = array<i64: 8, 32>}, {pipeline_mode = #tpu.pipeline_mode<synchronous>, transform_indices = @transform_1, window_bounds = array<i64: 32, 128>}, {pipeline_mode = #tpu.pipeline_mode<synchronous>, transform_indices = @transform_2, window_bounds = array<i64: 1, 128>}, {pipeline_mode = #tpu.pipeline_mode<synchronous>, transform_indices = @transform_3, window_bounds = array<i64: 128, 64>}, {pipeline_mode = #tpu.pipeline_mode<synchronous>, transform_indices = @transform_4, window_bounds = array<i64: 1, 64>}, {pipeline_mode = #tpu.pipeline_mode<synchronous>, transform_indices = @transform_5, window_bounds = array<i64: 64, 32>}, {pipeline_mode = #tpu.pipeline_mode<synchronous>, transform_indices = @transform_6, window_bounds = array<i64: 1, 32>}, {pipeline_mode = #tpu.pipeline_mode<synchronous>, transform_indices = @transform_7, window_bounds = array<i64: 32, 8>}, {pipeline_mode = #tpu.pipeline_mode<synchronous>, transform_indices = @transform_8, window_bounds = array<i64: 1, 8>}, {transform_indices = @transform_9, window_bounds = array<i64: 8, 8>}]} {
    %c0 = arith.constant 0 : index
    %c0_0 = arith.constant 0 : index
    %0 = vector.load %arg1[%c0, %c0_0] : memref<8x32xf32, #tpu.memory_space<vmem>>, vector<8x32xf32>
    %c0_1 = arith.constant 0 : index
    %c0_2 = arith.constant 0 : index
    %1 = vector.load %arg2[%c0_1, %c0_2] : memref<32x128xf32, #tpu.memory_space<vmem>>, vector<32x128xf32>
    %cst = arith.constant dense<0.000000e+00> : vector<8x128xf32>
    %2 = tpu.matmul %0, %1, %cst {dimension_numbers = #tpu.dot_dimension_numbers<[1], [0], [0], [1], [0, 0, 1, 1], [], []>} : vector<8x32xf32>, vector<32x128xf32>, vector<8x128xf32> -> vector<8x128xf32>
    %c0_3 = arith.constant 0 : index
    %c0_4 = arith.constant 0 : index
    %3 = vector.load %arg3[%c0_3, %c0_4] : memref<1x128xf32, #tpu.memory_space<vmem>>, vector<1x128xf32>
    %4 = vector.broadcast %3 : vector<1x128xf32> to vector<8x128xf32>
    %5 = arith.addf %2, %4 : vector<8x128xf32>
    %cst_5 = arith.constant 0.000000e+00 : f32
    %6 = vector.broadcast %cst_5 : f32 to vector<8x128xf32>
    %7 = arith.maximumf %5, %6 : vector<8x128xf32>
    %8 = arith.truncf %7 : vector<8x128xf32> to vector<8x128xbf16>
    %c0_6 = arith.constant 0 : index
    %c0_7 = arith.constant 0 : index
    %9 = vector.load %arg4[%c0_6, %c0_7] : memref<128x64xbf16, #tpu.memory_space<vmem>>, vector<128x64xbf16>
    %cst_8 = arith.constant dense<0.000000e+00> : vector<8x64xf32>
    %10 = tpu.matmul %8, %9, %cst_8 {dimension_numbers = #tpu.dot_dimension_numbers<[1], [0], [0], [1], [0, 0, 1, 1], [], []>} : vector<8x128xbf16>, vector<128x64xbf16>, vector<8x64xf32> -> vector<8x64xf32>
    %c0_9 = arith.constant 0 : index
    %c0_10 = arith.constant 0 : index
    %11 = vector.load %arg5[%c0_9, %c0_10] : memref<1x64xf32, #tpu.memory_space<vmem>>, vector<1x64xf32>
    %12 = vector.broadcast %11 : vector<1x64xf32> to vector<8x64xf32>
    %13 = arith.addf %10, %12 : vector<8x64xf32>
    %cst_11 = arith.constant 0.000000e+00 : f32
    %14 = vector.broadcast %cst_11 : f32 to vector<8x64xf32>
    %15 = arith.maximumf %13, %14 : vector<8x64xf32>
    %16 = arith.truncf %15 : vector<8x64xf32> to vector<8x64xbf16>
    %c0_12 = arith.constant 0 : index
    %c0_13 = arith.constant 0 : index
    %17 = vector.load %arg6[%c0_12, %c0_13] : memref<64x32xbf16, #tpu.memory_space<vmem>>, vector<64x32xbf16>
    %cst_14 = arith.constant dense<0.000000e+00> : vector<8x32xf32>
    %18 = tpu.matmul %16, %17, %cst_14 {dimension_numbers = #tpu.dot_dimension_numbers<[1], [0], [0], [1], [0, 0, 1, 1], [], []>} : vector<8x64xbf16>, vector<64x32xbf16>, vector<8x32xf32> -> vector<8x32xf32>
    %c0_15 = arith.constant 0 : index
    %c0_16 = arith.constant 0 : index
    %19 = vector.load %arg7[%c0_15, %c0_16] : memref<1x32xf32, #tpu.memory_space<vmem>>, vector<1x32xf32>
    %20 = vector.broadcast %19 : vector<1x32xf32> to vector<8x32xf32>
    %21 = arith.addf %18, %20 : vector<8x32xf32>
    %cst_17 = arith.constant 0.000000e+00 : f32
    %22 = vector.broadcast %cst_17 : f32 to vector<8x32xf32>
    %23 = arith.maximumf %21, %22 : vector<8x32xf32>
    %24 = arith.truncf %23 : vector<8x32xf32> to vector<8x32xbf16>
    %c0_18 = arith.constant 0 : index
    %c0_19 = arith.constant 0 : index
    %25 = vector.load %arg8[%c0_18, %c0_19] : memref<32x8xbf16, #tpu.memory_space<vmem>>, vector<32x8xbf16>
    %cst_20 = arith.constant dense<0.000000e+00> : vector<8x8xf32>
    %26 = tpu.matmul %24, %25, %cst_20 {dimension_numbers = #tpu.dot_dimension_numbers<[1], [0], [0], [1], [0, 0, 1, 1], [], []>} : vector<8x32xbf16>, vector<32x8xbf16>, vector<8x8xf32> -> vector<8x8xf32>
    %c0_21 = arith.constant 0 : index
    %c0_22 = arith.constant 0 : index
    %27 = vector.load %arg9[%c0_21, %c0_22] : memref<1x8xf32, #tpu.memory_space<vmem>>, vector<1x8xf32>
    %28 = vector.broadcast %27 : vector<1x8xf32> to vector<8x8xf32>
    %29 = arith.addf %26, %28 : vector<8x8xf32>
    %c0_23 = arith.constant 0 : index
    %c0_24 = arith.constant 0 : index
    %30 = vector.load %arg10[%c0_23, %c0_24] : memref<8x8xf32, #tpu.memory_space<vmem>>, vector<8x8xf32>
    tpu.vector_store %arg10[%c0_23, %c0_24], %29 {strides = array<i32>} : memref<8x8xf32, #tpu.memory_space<vmem>>, vector<8x8xf32>,
    return
  }
  func.func @transform_0(%arg0: i32) -> (i32, i32) {
    %c0_i32 = arith.constant 0 : i32
    %c0_i32_0 = arith.constant 0 : i32
    return %arg0, %c0_i32 : i32, i32
  }
  func.func @transform_1(%arg0: i32) -> (i32, i32) {
    %c0_i32 = arith.constant 0 : i32
    %c0_i32_0 = arith.constant 0 : i32
    %c0_i32_1 = arith.constant 0 : i32
    return %c0_i32, %c0_i32_0 : i32, i32
  }
  func.func @transform_2(%arg0: i32) -> (i32, i32) {
    %c0_i32 = arith.constant 0 : i32
    %c0_i32_0 = arith.constant 0 : i32
    %c0_i32_1 = arith.constant 0 : i32
    return %c0_i32, %c0_i32_0 : i32, i32
  }
  func.func @transform_3(%arg0: i32) -> (i32, i32) {
    %c0_i32 = arith.constant 0 : i32
    %c0_i32_0 = arith.constant 0 : i32
    %c0_i32_1 = arith.constant 0 : i32
    return %c0_i32, %c0_i32_0 : i32, i32
  }
  func.func @transform_4(%arg0: i32) -> (i32, i32) {
    %c0_i32 = arith.constant 0 : i32
    %c0_i32_0 = arith.constant 0 : i32
    %c0_i32_1 = arith.constant 0 : i32
    return %c0_i32, %c0_i32_0 : i32, i32
  }
  func.func @transform_5(%arg0: i32) -> (i32, i32) {
    %c0_i32 = arith.constant 0 : i32
    %c0_i32_0 = arith.constant 0 : i32
    %c0_i32_1 = arith.constant 0 : i32
    return %c0_i32, %c0_i32_0 : i32, i32
  }
  func.func @transform_6(%arg0: i32) -> (i32, i32) {
    %c0_i32 = arith.constant 0 : i32
    %c0_i32_0 = arith.constant 0 : i32
    %c0_i32_1 = arith.constant 0 : i32
    return %c0_i32, %c0_i32_0 : i32, i32
  }
  func.func @transform_7(%arg0: i32) -> (i32, i32) {
    %c0_i32 = arith.constant 0 : i32
    %c0_i32_0 = arith.constant 0 : i32
    %c0_i32_1 = arith.constant 0 : i32
    return %c0_i32, %c0_i32_0 : i32, i32
  }
  func.func @transform_8(%arg0: i32) -> (i32, i32) {
    %c0_i32 = arith.constant 0 : i32
    %c0_i32_0 = arith.constant 0 : i32
    %c0_i32_1 = arith.constant 0 : i32
    return %c0_i32, %c0_i32_0 : i32, i32
  }
  func.func @transform_9(%arg0: i32) -> (i32, i32) {
    %c0_i32 = arith.constant 0 : i32
    %c0_i32_0 = arith.constant 0 : i32
    return %arg0, %c0_i32 : i32, i32
  }
}

</mosaic_0001>

<llo_original>
// kernel: vibration_classifier_forward.1
$region0: #{vibration_classifier_forward.1}
  #allocation0 [shape = 'u32[]', space=smem, size = 0x4, offset = 0x4, fixed_abs, tag = 'smem constant byte address 0x4 - core index']
  #allocation1 [shape = 'u32[144,128]{1,0:T(1,128)}', space=vmem, size = 0x12000, scoped, tag = 'internal scratch']
  %s0 = inlined_call_operand.vmem [shape: f32[8,32], index: 0, kind: input, shape index: {}]
  %s1 = inlined_call_operand.vmem [shape: f32[32,128], index: 1, kind: input, shape index: {}]
  %s2 = inlined_call_operand.vmem [shape: f32[1,128], index: 2, kind: input, shape index: {}]
  %s3 = inlined_call_operand.vmem [shape: bf16[128,64], index: 3, kind: input, shape index: {}]
  %s4 = inlined_call_operand.vmem [shape: f32[1,64], index: 4, kind: input, shape index: {}]
  %s5 = inlined_call_operand.vmem [shape: bf16[64,32], index: 5, kind: input, shape index: {}]
  %s6 = inlined_call_operand.vmem [shape: f32[1,32], index: 6, kind: input, shape index: {}]
  %s7 = inlined_call_operand.vmem [shape: bf16[32,8], index: 7, kind: input, shape index: {}]
  %s8 = inlined_call_operand.vmem [shape: f32[1,8], index: 8, kind: input, shape index: {}]
  %s9 = inlined_call_operand.vmem [shape: f32[8,8], index: 9, kind: output, shape index: {}]
  %s10 = sld [smem:[#allocation0]]
  $region46: #{vibration_classifier_forward.1} parent=0
    _
  %s12 = ssub.s32 1, %s10
  %s13 = scalar_select 0, %s12, %s10
  // Predicated region
  $region2: #{vibration_classifier_forward.1} parent=0 // pred_check
    _
  $region3: #{vibration_classifier_forward.1} parent=0 // pred_check_branch
    %15 = sbr.rel (0) target = $region5
  $region4: #{vibration_classifier_forward.1} parent=0 // pred_region
    _
  $region5: #{vibration_classifier_forward.1} parent=0 // pred_fallthru
    _
  // Predicated region
  $region6: #{vibration_classifier_forward.1} parent=0 // pred_check
    _
  $region7: #{vibration_classifier_forward.1} parent=0 // pred_check_branch
    %17 = sbr.rel (0) target = $region9
  $region8: #{vibration_classifier_forward.1} parent=0 // pred_region
    _
  $region9: #{vibration_classifier_forward.1} parent=0 // pred_fallthru
    _
  // Predicated region
  $region10: #{vibration_classifier_forward.1} parent=0 // pred_check
    _
  $region11: #{vibration_classifier_forward.1} parent=0 // pred_check_branch
    %19 = sbr.rel (0) target = $region13
  $region12: #{vibration_classifier_forward.1} parent=0 // pred_region
    _
  $region13: #{vibration_classifier_forward.1} parent=0 // pred_fallthru
    _
  // Predicated region
  $region14: #{vibration_classifier_forward.1} parent=0 // pred_check
    _
  $region15: #{vibration_classifier_forward.1} parent=0 // pred_check_branch
    %21 = sbr.rel (0) target = $region17
  $region16: #{vibration_classifier_forward.1} parent=0 // pred_region
    _
  $region17: #{vibration_classifier_forward.1} parent=0 // pred_fallthru
    _
  // Predicated region
  $region18: #{vibration_classifier_forward.1} parent=0 // pred_check
    _
  $region19: #{vibration_classifier_forward.1} parent=0 // pred_check_branch
    %23 = sbr.rel (0) target = $region21
  $region20: #{vibration_classifier_forward.1} parent=0 // pred_region
    _
  $region21: #{vibration_classifier_forward.1} parent=0 // pred_fallthru
    _
  // Predicated region
  $region22: #{vibration_classifier_forward.1} parent=0 // pred_check
    _
  $region23: #{vibration_classifier_forward.1} parent=0 // pred_check_branch
    %25 = sbr.rel (0) target = $region25
  $region24: #{vibration_classifier_forward.1} parent=0 // pred_region
    _
  $region25: #{vibration_classifier_forward.1} parent=0 // pred_fallthru
    _
  // Predicated region
  $region26: #{vibration_classifier_forward.1} parent=0 // pred_check
    _
  $region27: #{vibration_classifier_forward.1} parent=0 // pred_check_branch
    %27 = sbr.rel (0) target = $region29
  $region28: #{vibration_classifier_forward.1} parent=0 // pred_region
    _
  $region29: #{vibration_classifier_forward.1} parent=0 // pred_fallthru
    _
  // Predicated region
  $region30: #{vibration_classifier_forward.1} parent=0 // pred_check
    _
  $region31: #{vibration_classifier_forward.1} parent=0 // pred_check_branch
    %29 = sbr.rel (0) target = $region33
  $region32: #{vibration_classifier_forward.1} parent=0 // pred_region
    _
  $region33: #{vibration_classifier_forward.1} parent=0 // pred_fallthru
    _
  // Predicated region
  $region34: #{vibration_classifier_forward.1} parent=0 // pred_check
    _
  $region35: #{vibration_classifier_forward.1} parent=0 // pred_check_branch
    %31 = sbr.rel (0) target = $region37
  $region36: #{vibration_classifier_forward.1} parent=0 // pred_region
    _
  $region37: #{vibration_classifier_forward.1} parent=0 // pred_fallthru
    _
  %v33 = vld [vmem:[%s0] sm:$0xff]
  %v34 = vld [vmem:[%s1] sm:$0xff]
  %v35 = vld [vmem:[%s1 + $0x8] sm:$0xff]
  %v36 = vld [vmem:[%s1 + $0x10] sm:$0xff]
  %v37 = vld [vmem:[%s1 + $0x18] sm:$0xff]
  %v38 = vld [vmem:[%s2] sm:$0x1]
  %v40 = vlaneseq
  %v41 = vshrl.u32 %v40, 7
  %v42 = vsub.s32 0, %v41
  %v43 = vrot.slane %v38, %v42
  %vm45 = vcmask 261120
  %v47 = vsel %vm45, %v33, 0
  %49 = vmatprep.subr.mxu0 0.0
  %50 = vmatpush1.msra.mxu0 %v34
  %51 = vmatprep.subr.mxu0 0.0
  %52 = vmatpush1.msra.mxu0 %v35
  %53 = vmatprep.subr.mxu0 0.0
  %54 = vmatpush1.msra.mxu0 %v36
  %55 = vmatprep.subr.mxu0 0.0
  %56 = vmatpush1.msra.mxu0 %v37
  %57 = vmatprep.subr.mxu0 0.0
  %58 = vmatpush1.msra.mxu0 0.0
  %59 = vmatprep.subr.mxu0 0.0
  %60 = vmatpush1.msra.mxu0 0.0
  %61 = vmatprep.subr.mxu0 0.0
  %62 = vmatpush1.msra.mxu0 0.0
  %63 = vmatprep.subr.mxu0 0.0
  %64 = vmatpush1.msra.mxu0 0.0
  %65 = vmatprep.subr.mxu0 0.0
  %66 = vmatpush1.msra.mxu0 0.0
  %67 = vmatprep.subr.mxu0 0.0
  %68 = vmatpush1.msra.mxu0 0.0
  %69 = vmatprep.subr.mxu0 0.0
  %70 = vmatpush1.msra.mxu0 0.0
  %71 = vmatprep.subr.mxu0 0.0
  %72 = vmatpush1.msra.mxu0 0.0
  %73 = vmatprep.subr.mxu0 0.0
  %74 = vmatpush1.msra.mxu0 0.0
  %75 = vmatprep.subr.mxu0 0.0
  %76 = vmatpush1.msra.mxu0 0.0
  %77 = vmatprep.subr.mxu0 0.0
  %78 = vmatpush1.msra.mxu0 0.0
  %79 = vmatprep.subr.mxu0 0.0
  %80 = vmatpush1.msra.mxu0 0.0
  %81 = vmatprep.subr.mxu0 0.0
  %82 = vmatpush1.msra.mxu0 0.0
  %83 = vmatprep.subr.mxu0 0.0
  %84 = vmatpush1.msra.mxu0 0.0
  %85 = vmatprep.subr.mxu0 0.0
  %86 = vmatpush1.msra.mxu0 0.0
  %87 = vmatprep.subr.mxu0 0.0
  %88 = vmatpush1.msra.mxu0 0.0
  %89 = vmatprep.subr.mxu0 0.0
  %90 = vmatpush1.msra.mxu0 0.0
  %91 = vmatprep.subr.mxu0 0.0
  %92 = vmatpush1.msra.mxu0 0.0
  %93 = vmatprep.subr.mxu0 0.0
  %94 = vmatpush1.msra.mxu0 0.0
  %95 = vmatprep.subr.mxu0 0.0
  %96 = vmatpush1.msra.mxu0 0.0
  %97 = vmatprep.subr.mxu0 0.0
  %98 = vmatpush1.msra.mxu0 0.0
  %99 = vmatprep.subr.mxu0 0.0
  %100 = vmatpush1.msra.mxu0 0.0
  %101 = vmatprep.subr.mxu0 0.0
  %102 = vmatpush1.msra.mxu0 0.0
  %103 = vmatprep.subr.mxu0 0.0
  %104 = vmatpush1.msra.mxu0 0.0
  %105 = vmatprep.subr.mxu0 0.0
  %106 = vmatpush1.msra.mxu0 0.0
  %107 = vmatprep.subr.mxu0 0.0
  %108 = vmatpush1.msra.mxu0 0.0
  %109 = vmatprep.subr.mxu0 0.0
  %110 = vmatpush1.msra.mxu0 0.0
  %111 = vmatprep.subr.mxu0 0.0
  %112 = vmatpush1.msra.mxu0 0.0
  %113 = vmatprep.mubr.f32.mxu0 0.0
  %114 = vmatmul.mubr.f32.gmra.mrb[0].mxu0 %v47
  %v115 = vpop.f32.mrb[0].mxu0
  %v116 = vadd.f32 %v43, %v115
  %v117 = vpop.f32.mrb[0].mxu0
  %118 = vdwg.mxu0
  %v119 = vmax.f32 %v116, 0.0
  %v120 = vpack.c.bf16 %v119, %v119
  %v121 = vld [vmem:[%s3] sm:$0xf]
  %v122 = vld [vmem:[%s3 + $0x4] sm:$0xf]
  %v123 = vld [vmem:[%s3 + $0x8] sm:$0xf]
  %v124 = vld [vmem:[%s3 + $0xc] sm:$0xf]
  %v125 = vld [vmem:[%s3 + $0x10] sm:$0xf]
  %v126 = vld [vmem:[%s3 + $0x14] sm:$0xf]
  %v127 = vld [vmem:[%s3 + $0x18] sm:$0xf]
  %v128 = vld [vmem:[%s3 + $0x1c] sm:$0xf]
  %v129 = vld [vmem:[%s3 + $0x20] sm:$0xf]
  %v130 = vld [vmem:[%s3 + $0x24] sm:$0xf]
  %v131 = vld [vmem:[%s3 + $0x28] sm:$0xf]
  %v132 = vld [vmem:[%s3 + $0x2c] sm:$0xf]
  %v133 = vld [vmem:[%s3 + $0x30] sm:$0xf]
  %v134 = vld [vmem:[%s3 + $0x34] sm:$0xf]
  %v135 = vld [vmem:[%s3 + $0x38] sm:$0xf]
  %v136 = vld [vmem:[%s3 + $0x3c] sm:$0xf]
  %v137 = vld [vmem:[%s4] sm:$0x1]
  %v139 = vlaneseq
  %v140 = vshrl.u32 %v139, 7
  %v141 = vsub.s32 0, %v140
  %v142 = vrot.slane %v137, %v141
  %v160 = vunpack.c.l.b16 %v121
  %v161 = vunpack.c.l.b16 %v122
  %v162 = vunpack.c.l.b16 %v123
  %v163 = vunpack.c.l.b16 %v124
  %v164 = vunpack.c.l.b16 %v125
  %v165 = vunpack.c.l.b16 %v126
  %v166 = vunpack.c.l.b16 %v127
  %v167 = vunpack.c.l.b16 %v128
  %v168 = vunpack.c.l.b16 %v129
  %v169 = vunpack.c.l.b16 %v130
  %v170 = vunpack.c.l.b16 %v131
  %v171 = vunpack.c.l.b16 %v132
  %v172 = vunpack.c.l.b16 %v133
  %v173 = vunpack.c.l.b16 %v134
  %v174 = vunpack.c.l.b16 %v135
  %v175 = vunpack.c.l.b16 %v136
  %v176 = vpack.c.b16 %v161, %v160
  %v177 = vpack.c.b16 %v163, %v162
  %v178 = vpack.c.b16 %v165, %v164
  %v179 = vpack.c.b16 %v167, %v166
  %v180 = vpack.c.b16 %v169, %v168
  %v181 = vpack.c.b16 %v171, %v170
  %v182 = vpack.c.b16 %v173, %v172
  %v183 = vpack.c.b16 %v175, %v174
  %192 = vmatprep.subr.bf16.mxu0 0
  %193 = vmatpush1.bf16.msra.mxu0 %v176
  %194 = vmatprep.subr.bf16.mxu0 0
  %195 = vmatpush1.bf16.msra.mxu0 %v177
  %196 = vmatprep.subr.bf16.mxu0 0
  %197 = vmatpush1.bf16.msra.mxu0 %v178
  %198 = vmatprep.subr.bf16.mxu0 0
  %199 = vmatpush1.bf16.msra.mxu0 %v179
  %200 = vmatprep.subr.bf16.mxu0 0
  %201 = vmatpush1.bf16.msra.mxu0 %v180
  %202 = vmatprep.subr.bf16.mxu0 0
  %203 = vmatpush1.bf16.msra.mxu0 %v181
  %204 = vmatprep.subr.bf16.mxu0 0
  %205 = vmatpush1.bf16.msra.mxu0 %v182
  %206 = vmatprep.subr.bf16.mxu0 0
  %207 = vmatpush1.bf16.msra.mxu0 %v183
  %208 = vmatprep.subr.bf16.mxu0 0
  %209 = vmatpush1.bf16.msra.mxu0 0
  %210 = vmatprep.subr.bf16.mxu0 0
  %211 = vmatpush1.bf16.msra.mxu0 0
  %212 = vmatprep.subr.bf16.mxu0 0
  %213 = vmatpush1.bf16.msra.mxu0 0
  %214 = vmatprep.subr.bf16.mxu0 0
  %215 = vmatpush1.bf16.msra.mxu0 0
  %216 = vmatprep.subr.bf16.mxu0 0
  %217 = vmatpush1.bf16.msra.mxu0 0
  %218 = vmatprep.subr.bf16.mxu0 0
  %219 = vmatpush1.bf16.msra.mxu0 0
  %220 = vmatprep.subr.bf16.mxu0 0
  %221 = vmatpush1.bf16.msra.mxu0 0
  %222 = vmatprep.subr.bf16.mxu0 0
  %223 = vmatpush1.bf16.msra.mxu0 0
  %224 = vmatprep.mubr.bf16.mxu0 0
  %225 = vmatmul.mubr.bf16.gmra.mrb[0].mxu0 %v120
  %v226 = vpop.f32.mrb[0].mxu0
  %v227 = vadd.f32 %v142, %v226
  %v228 = vpop.f32.mrb[0].mxu0
  %v229 = vpop.f32.mrb[0].mxu0
  %v230 = vpop.f32.mrb[0].mxu0
  %231 = vdwg.mxu0
  %v232 = vmax.f32 %v227, 0.0
  %v233 = vpack.c.bf16 %v232, %v232
  %v234 = vld [vmem:[%s5] sm:$0xf]
  %v235 = vld [vmem:[%s5 + $0x4] sm:$0xf]
  %v236 = vld [vmem:[%s5 + $0x8] sm:$0xf]
  %v237 = vld [vmem:[%s5 + $0xc] sm:$0xf]
  %v238 = vld [vmem:[%s5 + $0x10] sm:$0xf]
  %v239 = vld [vmem:[%s5 + $0x14] sm:$0xf]
  %v240 = vld [vmem:[%s5 + $0x18] sm:$0xf]
  %v241 = vld [vmem:[%s5 + $0x1c] sm:$0xf]
  %v242 = vld [vmem:[%s6] sm:$0x1]
  %v244 = vlaneseq
  %v245 = vshrl.u32 %v244, 7
  %v246 = vsub.s32 0, %v245
  %v247 = vrot.slane %v242, %v246
  %v257 = vunpack.c.l.b16 %v234
  %v258 = vunpack.c.l.b16 %v235
  %v259 = vunpack.c.l.b16 %v236
  %v260 = vunpack.c.l.b16 %v237
  %v261 = vunpack.c.l.b16 %v238
  %v262 = vunpack.c.l.b16 %v239
  %v263 = vunpack.c.l.b16 %v240
  %v264 = vunpack.c.l.b16 %v241
  %v265 = vpack.c.b16 %v258, %v257
  %v266 = vpack.c.b16 %v260, %v259
  %v267 = vpack.c.b16 %v262, %v261
  %v268 = vpack.c.b16 %v264, %v263
  %vm273 = vcmask 523264
  %v275 = vsel %vm273, %v233, 0
  %277 = vmatprep.subr.bf16.mxu0 0
  %278 = vmatpush1.bf16.msra.mxu0 %v265
  %279 = vmatprep.subr.bf16.mxu0 0
  %280 = vmatpush1.bf16.msra.mxu0 %v266
  %281 = vmatprep.subr.bf16.mxu0 0
  %282 = vmatpush1.bf16.msra.mxu0 %v267
  %283 = vmatprep.subr.bf16.mxu0 0
  %284 = vmatpush1.bf16.msra.mxu0 %v268
  %285 = vmatprep.subr.bf16.mxu0 0
  %286 = vmatpush1.bf16.msra.mxu0 0
  %287 = vmatprep.subr.bf16.mxu0 0
  %288 = vmatpush1.bf16.msra.mxu0 0
  %289 = vmatprep.subr.bf16.mxu0 0
  %290 = vmatpush1.bf16.msra.mxu0 0
  %291 = vmatprep.subr.bf16.mxu0 0
  %292 = vmatpush1.bf16.msra.mxu0 0
  %293 = vmatprep.subr.bf16.mxu0 0
  %294 = vmatpush1.bf16.msra.mxu0 0
  %295 = vmatprep.subr.bf16.mxu0 0
  %296 = vmatpush1.bf16.msra.mxu0 0
  %297 = vmatprep.subr.bf16.mxu0 0
  %298 = vmatpush1.bf16.msra.mxu0 0
  %299 = vmatprep.subr.bf16.mxu0 0
  %300 = vmatpush1.bf16.msra.mxu0 0
  %301 = vmatprep.subr.bf16.mxu0 0
  %302 = vmatpush1.bf16.msra.mxu0 0
  %303 = vmatprep.subr.bf16.mxu0 0
  %304 = vmatpush1.bf16.msra.mxu0 0
  %305 = vmatprep.subr.bf16.mxu0 0
  %306 = vmatpush1.bf16.msra.mxu0 0
  %307 = vmatprep.subr.bf16.mxu0 0
  %308 = vmatpush1.bf16.msra.mxu0 0
  %309 = vmatprep.mubr.bf16.mxu0 0
  %310 = vmatmul.mubr.bf16.gmra.mrb[0].mxu0 %v275
  %v311 = vpop.f32.mrb[0].mxu0
  %v312 = vadd.f32 %v247, %v311
  %v313 = vpop.f32.mrb[0].mxu0
  %v314 = vpop.f32.mrb[0].mxu0
  %v315 = vpop.f32.mrb[0].mxu0
  %316 = vdwg.mxu0
  %v317 = vmax.f32 %v312, 0.0
  %v318 = vpack.c.bf16 %v317, %v317
  %v319 = vld [vmem:[%s7] sm:$0xf]
  %v320 = vld [vmem:[%s7 + $0x4] sm:$0xf]
  %v321 = vld [vmem:[%s7 + $0x8] sm:$0xf]
  %v322 = vld [vmem:[%s7 + $0xc] sm:$0xf]
  %v323 = vld [vmem:[%s8] sm:$0x1]
  %v325 = vlaneseq
  %v326 = vshrl.u32 %v325, 7
  %v327 = vsub.s32 0, %v326
  %v328 = vrot.slane %v323, %v327
  %v334 = vunpack.c.l.b16 %v319
  %v335 = vunpack.c.l.b16 %v320
  %v336 = vunpack.c.l.b16 %v321
  %v337 = vunpack.c.l.b16 %v322
  %v338 = vpack.c.b16 %v335, %v334
  %v339 = vpack.c.b16 %v337, %v336
  %v343 = vsel %vm45, %v318, 0
  %345 = vmatprep.subr.bf16.mxu0 0
  %346 = vmatpush1.bf16.msra.mxu0 %v338
  %347 = vmatprep.subr.bf16.mxu0 0
  %348 = vmatpush1.bf16.msra.mxu0 %v339
  %349 = vmatprep.subr.bf16.mxu0 0
  %350 = vmatpush1.bf16.msra.mxu0 0
  %351 = vmatprep.subr.bf16.mxu0 0
  %352 = vmatpush1.bf16.msra.mxu0 0
  %353 = vmatprep.subr.bf16.mxu0 0
  %354 = vmatpush1.bf16.msra.mxu0 0
  %355 = vmatprep.subr.bf16.mxu0 0
  %356 = vmatpush1.bf16.msra.mxu0 0
  %357 = vmatprep.subr.bf16.mxu0 0
  %358 = vmatpush1.bf16.msra.mxu0 0
  %359 = vmatprep.subr.bf16.mxu0 0
  %360 = vmatpush1.bf16.msra.mxu0 0
  %361 = vmatprep.subr.bf16.mxu0 0
  %362 = vmatpush1.bf16.msra.mxu0 0
  %363 = vmatprep.subr.bf16.mxu0 0
  %364 = vmatpush1.bf16.msra.mxu0 0
  %365 = vmatprep.subr.bf16.mxu0 0
  %366 = vmatpush1.bf16.msra.mxu0 0
  %367 = vmatprep.subr.bf16.mxu0 0
  %368 = vmatpush1.bf16.msra.mxu0 0
  %369 = vmatprep.subr.bf16.mxu0 0
  %370 = vmatpush1.bf16.msra.mxu0 0
  %371 = vmatprep.subr.bf16.mxu0 0
  %372 = vmatpush1.bf16.msra.mxu0 0
  %373 = vmatprep.subr.bf16.mxu0 0
  %374 = vmatpush1.bf16.msra.mxu0 0
  %375 = vmatprep.subr.bf16.mxu0 0
  %376 = vmatpush1.bf16.msra.mxu0 0
  %377 = vmatprep.mubr.bf16.mxu0 0
  %378 = vmatmul.mubr.bf16.gmra.mrb[0].mxu0 %v343
  %v379 = vpop.f32.mrb[0].mxu0
  %v380 = vadd.f32 %v328, %v379
  %v381 = vpop.f32.mrb[0].mxu0
  %v382 = vpop.f32.mrb[0].mxu0
  %v383 = vpop.f32.mrb[0].mxu0
  %384 = vdwg.mxu0
  %vm385 = vcmask 64512
  %386 = vst.msk [vmem:[%s9] sm:$0xff] %vm385, %v380
  // Predicated region
  $region38: #{vibration_classifier_forward.1} parent=0 // pred_check
    _
  $region39: #{vibration_classifier_forward.1} parent=0 // pred_check_branch
    %388 = sbr.rel (0) target = $region41
  $region40: #{vibration_classifier_forward.1} parent=0 // pred_region
    _
  $region41: #{vibration_classifier_forward.1} parent=0 // pred_fallthru
    _
  // Predicated region
  $region42: #{vibration_classifier_forward.1} parent=0 // pred_check
    _
  $region43: #{vibration_classifier_forward.1} parent=0 // pred_check_branch
    %390 = sbr.rel (0) target = $region45
  $region44: #{vibration_classifier_forward.1} parent=0 // pred_region
    _
  $region45: #{vibration_classifier_forward.1} parent=0 // pred_fallthru
    _

</llo_original>
